<compile_context>
chip_gen: v7x
topology: tpu7x:2x2x1
jax: 0.10.0
libtpu: 0.0.40
codegen_flags: <defaults>
</compile_context>

<pallas_src>
import functools

import numpy as np
import jax
import jax.numpy as jnp
from jax import lax
from jax.experimental import pallas as pl
from jax.experimental.pallas import tpu as pltpu


def _corr_kernel(q_ref, kf_ref, mv_ref, *, bblk):
    """Channel-mean circular correlation for `bblk` batch elements.

    q_ref : (bblk, L, C)  queries
    kf_ref: (bblk, L, C)  circularly flipped keys, kf[u] = k[(L - u) % L]
    mv_ref: (bblk, 1, L)  f32 mean_value[b, 0, tau]
    """
    L = q_ref.shape[1]
    C = q_ref.shape[2]
    inv_c = 1.0 / float(C)
    for b in range(bblk):                      # static, bblk is small (<= 8)
        # Gram matrix on the MXU: G[i, j] = sum_c q[i, c] * kf[j, c]
        g = lax.dot_general(q_ref[b], kf_ref[b],
                            (((1,), (1,)), ((), ())),
                            preferred_element_type=jnp.float32)     # (L, L)
        # Skew on the XLU (separate VLIW slot): R[i, j] = G[i, (j - i) % L]
        r = pltpu.roll(g, shift=0, axis=1, stride=1, stride_axis=0)
        # Sum over rows -> circular correlation; divide by channel count.
        mv_ref[b] = jnp.sum(r, axis=0, keepdims=True) * inv_c       # (1, L)


def _agg_kernel(delay_ref, w_ref, v_ref, out_ref, vd_ref, *, top_k, bblk, chunk):
    """Delay aggregation for `bblk` batch elements.

    delay_ref: (top_k,)      int32 delays        (scalar prefetch, SMEM)
    w_ref    : (B, top_k)    f32 softmax weights (scalar prefetch, SMEM)
    v_ref    : (bblk, L, M)  values              (VMEM, input dtype)
    out_ref  : (bblk, L, M)  f32: out[t] = sum_i w[b, i] * v[(t + d_i) % L]
    vd_ref   : (2L, M)       VMEM scratch: values doubled along the sequence
    """
    g = pl.program_id(0)
    L = v_ref.shape[1]
    n_chunks = L // chunk
    delays = [delay_ref[i] for i in range(top_k)]          # hoisted SMEM reads

    for b in range(bblk):                                   # static unroll
        # Build the circular (doubled) value buffer in VMEM, chunk by chunk,
        # so live vreg footprint stays tiny.
        def fill(ci, carry):
            r0 = ci * chunk
            rows = v_ref[b, pl.ds(r0, chunk), :]
            vd_ref[pl.ds(r0, chunk), :] = rows
            vd_ref[pl.ds(L + r0, chunk), :] = rows
            return carry
        lax.fori_loop(0, n_chunks, fill, 0)

        ws = [w_ref[g * bblk + b, i] for i in range(top_k)]  # SMEM scalars

        # Chunked accumulation: acc is (chunk, M) f32 (a few vregs), the small
        # static top_k loop is unrolled inside.
        def body(ci, carry):
            r0 = ci * chunk
            acc = vd_ref[pl.ds(r0 + delays[0], chunk), :].astype(jnp.float32) * ws[0]
            for i in range(1, top_k):
                acc = acc + (vd_ref[pl.ds(r0 + delays[i], chunk), :]
                             .astype(jnp.float32) * ws[i])
            out_ref[b, pl.ds(r0, chunk), :] = acc
            return carry
        lax.fori_loop(0, n_chunks, body, 0)


def _pick_batch_block(B, per_batch_bytes, budget_bytes):
    """Batches per grid step: amortize per-step overhead, keep >= 2 grid steps
    (so the "parallel" batch axis can still split across TensorCores) and stay
    inside the VMEM block budget."""
    if B <= 1:
        return 1
    cap = min(max(1, B // 2), 8, max(1, budget_bytes // max(1, per_batch_bytes)))
    bblk = 1
    for cand in range(1, cap + 1):
        if B % cand == 0:
            bblk = cand
    return bblk


def auto_correlation(queries, keys, values, factor=1):
    """queries: (B, Lq, H, E), keys: (B, S, H, E), values: (B, S, H, D).
    Returns (out: (B, Lq, H, D), None) -- matches AutoCorrelation.forward
    with output_attention=False in training mode."""
    B, Lq, H, E = queries.shape
    S, D = values.shape[1], values.shape[3]
    if Lq > S:
        pad = Lq - S
        keys = jnp.concatenate([keys, jnp.zeros((B, pad, H, E), keys.dtype)], axis=1)
        values = jnp.concatenate([values, jnp.zeros((B, pad, H, D), values.dtype)], axis=1)
    else:
        keys = keys[:, :Lq]
        values = values[:, :Lq]
    L = Lq
    C = H * E                     # correlation channels (lane axis)
    M = H * D                     # value channels       (lane axis)

    # Lane-dense layout (B, L, channels); no dtype up-cast (bf16 stays bf16).
    q = queries.reshape(B, L, C)
    k = keys.reshape(B, L, C)
    v = values.reshape(B, L, M)

    # Circularly flipped keys: kf[:, u] = k[:, (L - u) % L]  (turns the skewed
    # Gram-diagonal sum into the cross-correlation instead of a convolution).
    kf = jnp.roll(jnp.flip(k, axis=1), 1, axis=1)

    q_isz = jnp.dtype(q.dtype).itemsize
    v_isz = jnp.dtype(v.dtype).itemsize

    block_budget = 16 * 1024 * 1024                 # per-block (pre double-buffer)
    bblk_a = _pick_batch_block(B, 2 * L * C * q_isz + 4 * L, block_budget)
    bblk_b = _pick_batch_block(B, L * M * (v_isz + 4), block_budget)

    params = pltpu.CompilerParams(
        dimension_semantics=("parallel",),          # shard batch blocks over TCs
        vmem_limit_bytes=48 * 1024 * 1024)          # headroom on v7x's 64 MiB VMEM

    # ------------------------------------------------------------------
    # Kernel A: Gram matmul + roll-skew circular correlation, grid over batch.
    # ------------------------------------------------------------------
    mv = pl.pallas_call(
        functools.partial(_corr_kernel, bblk=bblk_a),
        out_shape=jax.ShapeDtypeStruct((B, 1, L), jnp.float32),
        grid=(B // bblk_a,),
        in_specs=[pl.BlockSpec((bblk_a, L, C), lambda b: (b, 0, 0)),
                  pl.BlockSpec((bblk_a, L, C), lambda b: (b, 0, 0))],
        out_specs=pl.BlockSpec((bblk_a, 1, L), lambda b: (b, 0, 0)),
        compiler_params=params,
        cost_estimate=pl.CostEstimate(
            flops=2 * B * L * L * C,
            transcendentals=0,
            bytes_accessed=2 * B * L * C * q_isz + 4 * B * L),
    )(q, kf)
    mean_value = mv[:, 0, :]                                    # (B, L) f32

    # ------------------------------------------------------------------
    # Top-k delays + softmax weights on tiny arrays: plain JAX / XLA.
    # ------------------------------------------------------------------
    top_k = max(1, int(factor * np.log(L)))
    _, delays = lax.top_k(jnp.mean(mean_value, axis=0), top_k)  # (top_k,) int32
    weights = jnp.take(mean_value, delays, axis=1)              # (B, top_k)
    tmp_corr = jax.nn.softmax(weights, axis=-1).astype(jnp.float32)

    # ------------------------------------------------------------------
    # Kernel B: delay aggregation; values doubled in VMEM scratch (no HBM vd).
    # ------------------------------------------------------------------
    chunk = 8
    while L % chunk:
        chunk //= 2

    out = pl.pallas_call(
        functools.partial(_agg_kernel, top_k=top_k, bblk=bblk_b, chunk=chunk),
        out_shape=jax.ShapeDtypeStruct((B, L, M), jnp.float32),
        grid_spec=pltpu.PrefetchScalarGridSpec(
            num_scalar_prefetch=2,
            grid=(B // bblk_b,),
            in_specs=[pl.BlockSpec((bblk_b, L, M), lambda b, d, w: (b, 0, 0))],
            out_specs=pl.BlockSpec((bblk_b, L, M), lambda b, d, w: (b, 0, 0)),
            scratch_shapes=[pltpu.VMEM((2 * L, M), v.dtype)]),
        compiler_params=params,
        cost_estimate=pl.CostEstimate(
            flops=2 * B * top_k * L * M,
            transcendentals=0,
            bytes_accessed=B * L * M * v_isz + 4 * B * L * M),
    )(delays, tmp_corr, v)

    out = out.reshape(B, L, H, D)
    return out, None


def _reference(queries, keys, values, factor=1):
    """Pure-JAX replica of the PyTorch forward (training path) via FFT."""
    B, L, H, E = queries.shape
    q = jnp.transpose(queries, (0, 2, 3, 1))
    k = jnp.transpose(keys[:, :L], (0, 2, 3, 1))
    v = jnp.transpose(values[:, :L], (0, 2, 3, 1))
    qf = jnp.fft.rfft(q, axis=-1)
    kf = jnp.fft.rfft(k, axis=-1)
    corr = jnp.fft.irfft(qf * jnp.conj(kf), n=L, axis=-1)       # (B, H, E, L)
    top_k = max(1, int(factor * np.log(L)))
    mean_value = jnp.mean(jnp.mean(corr, axis=1), axis=1)       # (B, L)
    topk_idx = lax.top_k(jnp.mean(mean_value, axis=0), top_k)[1]
    weights = jnp.stack([mean_value[:, int(topk_idx[i])] for i in range(top_k)], axis=-1)
    tmp_corr = jax.nn.softmax(weights, axis=-1)                 # (B, top_k)
    agg = jnp.zeros_like(v)
    for i in range(top_k):
        pattern = jnp.roll(v, -int(topk_idx[i]), axis=-1)
        agg = agg + pattern * tmp_corr[:, i][:, None, None, None]
    return jnp.transpose(agg, (0, 3, 1, 2))                     # (B, L, H, D)


if __name__ == "__main__":
    key = jax.random.PRNGKey(0)
    # L and C=M multiples of 128 keep the Gram matmul / roll / stores aligned
    # (exercises bblk=2 batch blocking: grid of 2 parallel steps).
    B, L, H, E, D = 4, 128, 4, 32, 32
    kq, kk, kv = jax.random.split(key, 3)
    queries = jax.random.normal(kq, (B, L, H, E), jnp.float32)
    keys_in = jax.random.normal(kk, (B, L, H, E), jnp.float32)
    values = jax.random.normal(kv, (B, L, H, D), jnp.float32)

    out, attn = auto_correlation(queries, keys_in, values, factor=1)
    out = jax.block_until_ready(out)
    assert out.shape == (B, L, H, D) and attn is None

    ref = _reference(queries, keys_in, values, factor=1)
    np.testing.assert_allclose(np.asarray(out), np.asarray(ref), rtol=1e-3, atol=1e-3)
    print("KERNEL_OK")
</pallas_src>

<mosaic_0001>
module attributes {stable_mosaic.version = 11 : i64} {
  func.func @_corr_kernel(%arg0: i32, %arg1: memref<2x128x128xf32, #tpu.memory_space<vmem>>, %arg2: memref<2x128x128xf32, #tpu.memory_space<vmem>>, %arg3: memref<2x1x128xf32, #tpu.memory_space<vmem>>) attributes {dimension_semantics = [#tpu.dimension_semantics<parallel>], iteration_bounds = array<i64: 2>, scalar_prefetch = 0 : i64, scratch_operands = 0 : i64, tpu.core_type = #tpu.core_type<tc>, window_params = [{transform_indices = @transform_0, window_bounds = array<i64: 2, 128, 128>}, {transform_indices = @transform_1, window_bounds = array<i64: 2, 128, 128>}, {transform_indices = @transform_2, window_bounds = array<i64: 2, 1, 128>}]} {
    %c0 = arith.constant 0 : index
    %c0_0 = arith.constant 0 : index
    %c0_1 = arith.constant 0 : index
    %0 = vector.load %arg1[%c0, %c0_0, %c0_1] : memref<2x128x128xf32, #tpu.memory_space<vmem>>, vector<1x128x128xf32>
    %1 = vector.shape_cast %0 : vector<1x128x128xf32> to vector<128x128xf32>
    %c0_2 = arith.constant 0 : index
    %c0_3 = arith.constant 0 : index
    %c0_4 = arith.constant 0 : index
    %2 = vector.load %arg2[%c0_2, %c0_3, %c0_4] : memref<2x128x128xf32, #tpu.memory_space<vmem>>, vector<1x128x128xf32>
    %3 = vector.shape_cast %2 : vector<1x128x128xf32> to vector<128x128xf32>
    %cst = arith.constant dense<0.000000e+00> : vector<128x128xf32>
    %4 = tpu.matmul %1, %3, %cst {dimension_numbers = #tpu.dot_dimension_numbers<[1], [1], [0], [0], [0, 0, 1, 0], [], []>} : vector<128x128xf32>, vector<128x128xf32>, vector<128x128xf32> -> vector<128x128xf32>
    %c0_i32 = arith.constant 0 : i32
    %5 = tpu.dynamic_rotate %4 by %c0_i32 dim 1 {stride = 1 : si32, stride_dimension = 0 : si32} : vector<128x128xf32>, i32 -> vector<128x128xf32>
    %cst_5 = arith.constant dense<0.000000e+00> : vector<128xf32>
    %6 = vector.multi_reduction <add>, %5, %cst_5 [0] : vector<128x128xf32> to vector<128xf32>
    %7 = vector.shape_cast %6 : vector<128xf32> to vector<1x128xf32>
    %cst_6 = arith.constant 7.812500e-03 : f32
    %8 = vector.broadcast %cst_6 : f32 to vector<1x128xf32>
    %9 = arith.mulf %7, %8 : vector<1x128xf32>
    %c0_7 = arith.constant 0 : index
    %c0_8 = arith.constant 0 : index
    %c0_9 = arith.constant 0 : index
    %10 = vector.load %arg3[%c0_7, %c0_8, %c0_9] : memref<2x1x128xf32, #tpu.memory_space<vmem>>, vector<1x1x128xf32>
    %11 = vector.shape_cast %10 : vector<1x1x128xf32> to vector<1x128xf32>
    %12 = vector.shape_cast %9 : vector<1x128xf32> to vector<1x1x128xf32>
    tpu.vector_store %arg3[%c0_7, %c0_8, %c0_9], %12 {strides = array<i32>} : memref<2x1x128xf32, #tpu.memory_space<vmem>>, vector<1x1x128xf32>,
    %c1 = arith.constant 1 : index
    %c0_10 = arith.constant 0 : index
    %c0_11 = arith.constant 0 : index
    %13 = vector.load %arg1[%c1, %c0_10, %c0_11] : memref<2x128x128xf32, #tpu.memory_space<vmem>>, vector<1x128x128xf32>
    %14 = vector.shape_cast %13 : vector<1x128x128xf32> to vector<128x128xf32>
    %c1_12 = arith.constant 1 : index
    %c0_13 = arith.constant 0 : index
    %c0_14 = arith.constant 0 : index
    %15 = vector.load %arg2[%c1_12, %c0_13, %c0_14] : memref<2x128x128xf32, #tpu.memory_space<vmem>>, vector<1x128x128xf32>
    %16 = vector.shape_cast %15 : vector<1x128x128xf32> to vector<128x128xf32>
    %cst_15 = arith.constant dense<0.000000e+00> : vector<128x128xf32>
    %17 = tpu.matmul %14, %16, %cst_15 {dimension_numbers = #tpu.dot_dimension_numbers<[1], [1], [0], [0], [0, 0, 1, 0], [], []>} : vector<128x128xf32>, vector<128x128xf32>, vector<128x128xf32> -> vector<128x128xf32>
    %c0_i32_16 = arith.constant 0 : i32
    %18 = tpu.dynamic_rotate %17 by %c0_i32_16 dim 1 {stride = 1 : si32, stride_dimension = 0 : si32} : vector<128x128xf32>, i32 -> vector<128x128xf32>
    %cst_17 = arith.constant dense<0.000000e+00> : vector<128xf32>
    %19 = vector.multi_reduction <add>, %18, %cst_17 [0] : vector<128x128xf32> to vector<128xf32>
    %20 = vector.shape_cast %19 : vector<128xf32> to vector<1x128xf32>
    %cst_18 = arith.constant 7.812500e-03 : f32
    %21 = vector.broadcast %cst_18 : f32 to vector<1x128xf32>
    %22 = arith.mulf %20, %21 : vector<1x128xf32>
    %c1_19 = arith.constant 1 : index
    %c0_20 = arith.constant 0 : index
    %c0_21 = arith.constant 0 : index
    %23 = vector.load %arg3[%c1_19, %c0_20, %c0_21] : memref<2x1x128xf32, #tpu.memory_space<vmem>>, vector<1x1x128xf32>
    %24 = vector.shape_cast %23 : vector<1x1x128xf32> to vector<1x128xf32>
    %25 = vector.shape_cast %22 : vector<1x128xf32> to vector<1x1x128xf32>
    tpu.vector_store %arg3[%c1_19, %c0_20, %c0_21], %25 {strides = array<i32>} : memref<2x1x128xf32, #tpu.memory_space<vmem>>, vector<1x1x128xf32>,
    return
  }
  func.func @transform_0(%arg0: i32) -> (i32, i32, i32) {
    %c0_i32 = arith.constant 0 : i32
    %c0_i32_0 = arith.constant 0 : i32
    %c0_i32_1 = arith.constant 0 : i32
    return %arg0, %c0_i32, %c0_i32_0 : i32, i32, i32
  }
  func.func @transform_1(%arg0: i32) -> (i32, i32, i32) {
    %c0_i32 = arith.constant 0 : i32
    %c0_i32_0 = arith.constant 0 : i32
    %c0_i32_1 = arith.constant 0 : i32
    return %arg0, %c0_i32, %c0_i32_0 : i32, i32, i32
  }
  func.func @transform_2(%arg0: i32) -> (i32, i32, i32) {
    %c0_i32 = arith.constant 0 : i32
    %c0_i32_0 = arith.constant 0 : i32
    %c0_i32_1 = arith.constant 0 : i32
    return %arg0, %c0_i32, %c0_i32_0 : i32, i32, i32
  }
}

</mosaic_0001>

<llo_original>
// kernel: tpu_custom_call.1
$region0: #{tpu_custom_call.1}
  #allocation0 [shape = 'u32[]', space=smem, size = 0x4, offset = 0x4, fixed_abs, tag = 'smem constant byte address 0x4 - core index']
  #allocation1 [shape = 'u32[144,128]{1,0:T(1,128)}', space=vmem, size = 0x12000, scoped, tag = 'internal scratch']
  %s0 = inlined_call_operand.hbm [shape: f32[4,128,128], index: 0, kind: input, shape index: {}]
  %s1 = inlined_call_operand.hbm [shape: f32[4,128,128], index: 1, kind: input, shape index: {}]
  %s2 = inlined_call_operand.hbm [shape: f32[4,1,128], index: 2, kind: output, shape index: {}]
  %s3 = sld [smem:[#allocation0]]
  $region49: #{tpu_custom_call.1} parent=0
    _
  %s5 = ssub.s32 1, %s3
  %s6 = scalar_select 0, %s5, %s3
  $region1: #{tpu_custom_call.1} parent=0
    #allocation2 [shape = 'u8[262144]{0}', space=vmem, size = 0x40000, scoped, tag = 'input window, operand 0']
    #allocation3 [shape = 's32[2]{0}', space=sflag, size = 0x8, scoped, tag = 'scoped memory for tpu_custom_call.1']
    #allocation4 [shape = 's32[2]{0}', space=sflag, size = 0x8, scoped, tag = 'scoped memory for tpu_custom_call.1']
    #allocation5 [shape = 'u8[262144]{0}', space=vmem, size = 0x40000, scoped, tag = 'input window, operand 1']
    #allocation6 [shape = 's32[2]{0}', space=sflag, size = 0x8, scoped, tag = 'scoped memory for tpu_custom_call.1']
    #allocation7 [shape = 'u8[2048]{0}', space=vmem, size = 0x800, scoped, tag = 'output window, operand 0']
    %7 = vsyncpa [#allocation3], 0
    %s8 = scalar_lea.sflag [#allocation3], 1
    %9 = vsyncpa %s8, 0
    %10 = vsyncpa [#allocation6], 0
    %s11 = scalar_lea.sflag [#allocation6], 1
    %12 = vsyncpa %s11, 0
    %13 = vsyncpa [#allocation4], 0
    %s14 = scalar_lea.sflag [#allocation4], 1
    %15 = vsyncpa %s14, 0
    loop: start=0, step=1, limit=4
    $region2: #{tpu_custom_call.1} parent=1 // loop_pre_header
      _
    $region3: #{tpu_custom_call.1} parent=1 // loop_header
      %s17 = sphi 0, %s21
      %p18 = scmp.ge.s32.totalorder %s17, 4
      %s27 = sphi 0, %s29
      %s30 = sphi 0, %s27
      %s31 = sphi 0, %s30
      %s47 = sphi 0, %s31
      %s53 = sphi 0, %s55
      %s56 = sphi 0, %s53
      %s57 = sphi 0, %s56
      %s73 = sphi 0, %s57
      %s79 = sphi 0, %s81
      %s82 = sphi 0, %s79
      %s83 = sphi 0, %s82
      %s99 = sphi 0, %s83
    $region4: #{tpu_custom_call.1} parent=1 // loop_header_branch
      %20 = sbr.rel (%p18) target = $region8
    $region5: #{tpu_custom_call.1} parent=1 // loop_body
      %s22 = ssub.s32 %s17, 1
      %s23 = ssub.s32 %s17, 2
      %s24 = sadd.s32 %s17, 1
      %s25 = ssub.s32 %s17, %s24
      %p26 = scmp.eq.s32.totalorder %s25, 0
      %s28 = sadd.s32 %s27, 1
      %s29 = scalar_select %p26, %s27, %s28
      %p32 = pneg %p26
      %p33 = scmp.eq.s32.totalorder %s17, 1
      %p34 = por %p32, %p33
      %p35 = scmp.ne.s32.totalorder %s27, %s30
      %p36 = scmp.eq.s32.totalorder %s17, 0
      %p37 = por %p35, %p36
      %p38 = scmp.ne.s32.totalorder %s27, %s30
      %p39 = scmp.eq.s32.totalorder %s22, 1
      %p40 = por %p38, %p39
      %p41 = scmp.ne.s32.totalorder %s30, %s31
      %p42 = scmp.eq.s32.totalorder %s22, 0
      %p43 = por %p41, %p42
      %p44 = scmp.ne.s32.totalorder %s30, %s31
      %p45 = scmp.eq.s32.totalorder %s23, 1
      %p46 = por %p44, %p45
      %p48 = scmp.ne.s32.totalorder %s31, %s47
      %p49 = scmp.eq.s32.totalorder %s23, 0
      %p50 = por %p48, %p49
      %s51 = ssub.s32 %s17, %s24
      %p52 = scmp.eq.s32.totalorder %s51, 0
      %s54 = sadd.s32 %s53, 1
      %s55 = scalar_select %p52, %s53, %s54
      %p58 = pneg %p52
      %p59 = scmp.eq.s32.totalorder %s17, 1
      %p60 = por %p58, %p59
      %p61 = scmp.ne.s32.totalorder %s53, %s56
      %p62 = scmp.eq.s32.totalorder %s17, 0
      %p63 = por %p61, %p62
      %p64 = scmp.ne.s32.totalorder %s53, %s56
      %p65 = scmp.eq.s32.totalorder %s22, 1
      %p66 = por %p64, %p65
      %p67 = scmp.ne.s32.totalorder %s56, %s57
      %p68 = scmp.eq.s32.totalorder %s22, 0
      %p69 = por %p67, %p68
      %p70 = scmp.ne.s32.totalorder %s56, %s57
      %p71 = scmp.eq.s32.totalorder %s23, 1
      %p72 = por %p70, %p71
      %p74 = scmp.ne.s32.totalorder %s57, %s73
      %p75 = scmp.eq.s32.totalorder %s23, 0
      %p76 = por %p74, %p75
      %s77 = ssub.s32 %s17, %s24
      %p78 = scmp.eq.s32.totalorder %s77, 0
      %s80 = sadd.s32 %s79, 1
      %s81 = scalar_select %p78, %s79, %s80
      %p84 = pneg %p78
      %p85 = scmp.eq.s32.totalorder %s17, 1
      %p86 = por %p84, %p85
      %p87 = scmp.ne.s32.totalorder %s79, %s82
      %p88 = scmp.eq.s32.totalorder %s17, 0
      %p89 = por %p87, %p88
      %p90 = scmp.ne.s32.totalorder %s79, %s82
      %p91 = scmp.eq.s32.totalorder %s22, 1
      %p92 = por %p90, %p91
      %p93 = scmp.ne.s32.totalorder %s82, %s83
      %p94 = scmp.eq.s32.totalorder %s22, 0
      %p95 = por %p93, %p94
      %p96 = scmp.ne.s32.totalorder %s82, %s83
      %p97 = scmp.eq.s32.totalorder %s23, 1
      %p98 = por %p96, %p97
      %p100 = scmp.ne.s32.totalorder %s83, %s99
      %p101 = scmp.eq.s32.totalorder %s23, 0
      %p102 = por %p100, %p101
      %p103 = scmp.le.s32.totalorder 1, %s17
      %p104 = scmp.lt.s32.totalorder %s17, 3
      %p105 = pnand %p103, %p104
      %p106 = pneg %p105
      // Predicated region
      $region9: #{tpu_custom_call.1} parent=5 // pred_check
        _
      $region10: #{tpu_custom_call.1} parent=5 // pred_check_branch
        %108 = sbr.rel (%p105) target = $region12
      $region11: #{tpu_custom_call.1} parent=5 // pred_region
        %s109 = ssub.s32 %s17, 1
      $region12: #{tpu_custom_call.1} parent=5 // pred_fallthru
        _
      %p110 = scmp.lt.s32.totalorder %s17, 2
      // Predicated region
      $region13: #{tpu_custom_call.1} parent=5 // pred_check
        %p111 = pneg %p110
      $region14: #{tpu_custom_call.1} parent=5 // pred_check_branch
        %113 = sbr.rel (%p111) target = $region16
      $region15: #{tpu_custom_call.1} parent=5 // pred_region
        // Predicated region
        $region17: #{tpu_custom_call.1} parent=15 // pred_check
          %p114 = pneg %p37
        $region18: #{tpu_custom_call.1} parent=15 // pred_check_branch
          %116 = sbr.rel (%p114) target = $region20
        $region19: #{tpu_custom_call.1} parent=15 // pred_region
          %s117 = sand.u32 %s27, 1
          %s118 = scalar_lea.sflag [#allocation3], %s117
          %s119 = sand.u32 %s27, 1
          %s120 = smul.addr %s119, 256
          %s121 = scalar_lea.vmem [#allocation2], %s120
          %s122 = smul.u32 2, %s17
          %s124 = ssub.s32 4096, 4096
          %125 = vsyncadd %s118, %s124
          %s126 = smul.addr %s122, 16
          %s127 = smul.addr %s126, 128
          %s128 = scalar_lea.hbm %s0, %s127
          %s129 = sshll.u32 %s121, 4
          %s130 = int_to_ptr.vmem [resolvable:$true] %s129
          %135 = dma.hbm_to_vmem [thread:$0]  %s128, 4096, %s130, %s118, 128, 128, 8
        $region20: #{tpu_custom_call.1} parent=15 // pred_fallthru
          _
        // Predicated region
        $region21: #{tpu_custom_call.1} parent=15 // pred_check
          %p136 = pneg %p63
        $region22: #{tpu_custom_call.1} parent=15 // pred_check_branch
          %138 = sbr.rel (%p136) target = $region24
        $region23: #{tpu_custom_call.1} parent=15 // pred_region
          %s139 = sand.u32 %s53, 1
          %s140 = scalar_lea.sflag [#allocation6], %s139
          %s141 = sand.u32 %s53, 1
          %s142 = smul.addr %s141, 256
          %s143 = scalar_lea.vmem [#allocation5], %s142
          %s144 = smul.u32 2, %s17
          %s146 = ssub.s32 4096, 4096
          %147 = vsyncadd %s140, %s146
          %s148 = smul.addr %s144, 16
          %s149 = smul.addr %s148, 128
          %s150 = scalar_lea.hbm %s1, %s149
          %s151 = sshll.u32 %s143, 4
          %s152 = int_to_ptr.vmem [resolvable:$true] %s151
          %157 = dma.hbm_to_vmem [thread:$0]  %s150, 4096, %s152, %s140, 128, 128, 8
        $region24: #{tpu_custom_call.1} parent=15 // pred_fallthru
          _
      $region16: #{tpu_custom_call.1} parent=5 // pred_fallthru
        _
      %p158 = scmp.le.s32.totalorder 1, %s17
      %p159 = scmp.lt.s32.totalorder %s17, 3
      %p160 = pnand %p158, %p159
      %p161 = pneg %p160
      // Predicated region
      $region25: #{tpu_custom_call.1} parent=5 // pred_check
        _
      $region26: #{tpu_custom_call.1} parent=5 // pred_check_branch
        %163 = sbr.rel (%p160) target = $region28
      $region27: #{tpu_custom_call.1} parent=5 // pred_region
        %s164 = ssub.s32 %s17, 1
        %s165 = sand.u32 %s30, 1
        %s166 = scalar_lea.sflag [#allocation3], %s165
        %s167 = sand.u32 %s30, 1
        %s168 = smul.addr %s167, 256
        %s169 = scalar_lea.vmem [#allocation2], %s168
        // Predicated region
        $region29: #{tpu_custom_call.1} parent=27 // pred_check
          %p170 = pneg %p43
        $region30: #{tpu_custom_call.1} parent=27 // pred_check_branch
          %172 = sbr.rel (%p170) target = $region32
        $region31: #{tpu_custom_call.1} parent=27 // pred_region
          %173 = dma.done %s166, 4096
        $region32: #{tpu_custom_call.1} parent=27 // pred_fallthru
          _
        %s174 = sand.u32 %s56, 1
        %s175 = scalar_lea.sflag [#allocation6], %s174
        %s176 = sand.u32 %s56, 1
        %s177 = smul.addr %s176, 256
        %s178 = scalar_lea.vmem [#allocation5], %s177
        // Predicated region
        $region33: #{tpu_custom_call.1} parent=27 // pred_check
          %p179 = pneg %p69
        $region34: #{tpu_custom_call.1} parent=27 // pred_check_branch
          %181 = sbr.rel (%p179) target = $region36
        $region35: #{tpu_custom_call.1} parent=27 // pred_region
          %182 = dma.done %s175, 4096
        $region36: #{tpu_custom_call.1} parent=27 // pred_fallthru
          _
        %s183 = sand.u32 %s30, 1
        %s184 = scalar_lea.sflag [#allocation3], %s183
        %s185 = sand.u32 %s30, 1
        %s186 = smul.addr %s185, 256
        %s187 = scalar_lea.vmem [#allocation2], %s186
        %p188 = pneg %p43
        %p189 = pneg %p40
        %s190 = sand.u32 %s56, 1
        %s191 = scalar_lea.sflag [#allocation6], %s190
        %s192 = sand.u32 %s56, 1
        %s193 = smul.addr %s192, 256
        %s194 = scalar_lea.vmem [#allocation5], %s193
        %p195 = pneg %p69
        %p196 = pneg %p66
        %p197 = pneg %p95
        %p198 = pneg %p92
        %s199 = sand.u32 %s82, 1
        %s200 = scalar_lea.sflag [#allocation4], %s199
        %s201 = sand.u32 %s82, 1
        %s202 = smul.addr %s201, 2
        %s203 = scalar_lea.vmem [#allocation7], %s202
        %s204 = smul.u32 2, %s22
        %s205 = smul.u32 2, %s22
        %s206 = smul.u32 2, %s22
        %v207 = vld [vmem:[%s169] sm:$0xff]
        %v208 = vld [vmem:[%s169 + $0x8] sm:$0xff]
        %v209 = vld [vmem:[%s169 + $0x10] sm:$0xff]
        %v210 = vld [vmem:[%s169 + $0x18] sm:$0xff]
        %v211 = vld [vmem:[%s169 + $0x20] sm:$0xff]
        %v212 = vld [vmem:[%s169 + $0x28] sm:$0xff]
        %v213 = vld [vmem:[%s169 + $0x30] sm:$0xff]
        %v214 = vld [vmem:[%s169 + $0x38] sm:$0xff]
        %v215 = vld [vmem:[%s169 + $0x40] sm:$0xff]
        %v216 = vld [vmem:[%s169 + $0x48] sm:$0xff]
        %v217 = vld [vmem:[%s169 + $0x50] sm:$0xff]
        %v218 = vld [vmem:[%s169 + $0x58] sm:$0xff]
        %v219 = vld [vmem:[%s169 + $0x60] sm:$0xff]
        %v220 = vld [vmem:[%s169 + $0x68] sm:$0xff]
        %v221 = vld [vmem:[%s169 + $0x70] sm:$0xff]
        %v222 = vld [vmem:[%s169 + $0x78] sm:$0xff]
        %v223 = vld [vmem:[%s178] sm:$0xff]
        %v224 = vld [vmem:[%s178 + $0x8] sm:$0xff]
        %v225 = vld [vmem:[%s178 + $0x10] sm:$0xff]
        %v226 = vld [vmem:[%s178 + $0x18] sm:$0xff]
        %v227 = vld [vmem:[%s178 + $0x20] sm:$0xff]
        %v228 = vld [vmem:[%s178 + $0x28] sm:$0xff]
        %v229 = vld [vmem:[%s178 + $0x30] sm:$0xff]
        %v230 = vld [vmem:[%s178 + $0x38] sm:$0xff]
        %v231 = vld [vmem:[%s178 + $0x40] sm:$0xff]
        %v232 = vld [vmem:[%s178 + $0x48] sm:$0xff]
        %v233 = vld [vmem:[%s178 + $0x50] sm:$0xff]
        %v234 = vld [vmem:[%s178 + $0x58] sm:$0xff]
        %v235 = vld [vmem:[%s178 + $0x60] sm:$0xff]
        %v236 = vld [vmem:[%s178 + $0x68] sm:$0xff]
        %v237 = vld [vmem:[%s178 + $0x70] sm:$0xff]
        %v238 = vld [vmem:[%s178 + $0x78] sm:$0xff]
        %239 = vmatprep.subr.mxu0 0.0
        %240 = vmatpush1.xpose.msra.mxu0 %v223
        %241 = vmatprep.subr.mxu0 0.0
        %242 = vmatpush1.xpose.msra.mxu0 %v224
        %243 = vmatprep.subr.mxu0 0.0
        %244 = vmatpush1.xpose.msra.mxu0 %v225
        %245 = vmatprep.subr.mxu0 0.0
        %246 = vmatpush1.xpose.msra.mxu0 %v226
        %247 = vmatprep.subr.mxu0 0.0
        %248 = vmatpush1.xpose.msra.mxu0 %v227
        %249 = vmatprep.subr.mxu0 0.0
        %250 = vmatpush1.xpose.msra.mxu0 %v228
        %251 = vmatprep.subr.mxu0 0.0
        %252 = vmatpush1.xpose.msra.mxu0 %v229
        %253 = vmatprep.subr.mxu0 0.0
        %254 = vmatpush1.xpose.msra.mxu0 %v230
        %255 = vmatprep.subr.mxu0 0.0
        %256 = vmatpush1.xpose.msra.mxu0 %v231
        %257 = vmatprep.subr.mxu0 0.0
        %258 = vmatpush1.xpose.msra.mxu0 %v232
        %259 = vmatprep.subr.mxu0 0.0
        %260 = vmatpush1.xpose.msra.mxu0 %v233
        %261 = vmatprep.subr.mxu0 0.0
        %262 = vmatpush1.xpose.msra.mxu0 %v234
        %263 = vmatprep.subr.mxu0 0.0
        %264 = vmatpush1.xpose.msra.mxu0 %v235
        %265 = vmatprep.subr.mxu0 0.0
        %266 = vmatpush1.xpose.msra.mxu0 %v236
        %267 = vmatprep.subr.mxu0 0.0
        %268 = vmatpush1.xpose.msra.mxu0 %v237
        %269 = vmatprep.subr.mxu0 0.0
        %270 = vmatpush1.xpose.msra.mxu0 %v238
        %271 = vmatprep.subr.mxu0 0.0
        %272 = vmatpush1.xpose.msra.mxu0 0.0
        %273 = vmatprep.subr.mxu0 0.0
        %274 = vmatpush1.xpose.msra.mxu0 0.0
        %275 = vmatprep.subr.mxu0 0.0
        %276 = vmatpush1.xpose.msra.mxu0 0.0
        %277 = vmatprep.subr.mxu0 0.0
        %278 = vmatpush1.xpose.msra.mxu0 0.0
        %279 = vmatprep.subr.mxu0 0.0
        %280 = vmatpush1.xpose.msra.mxu0 0.0
        %281 = vmatprep.subr.mxu0 0.0
        %282 = vmatpush1.xpose.msra.mxu0 0.0
        %283 = vmatprep.subr.mxu0 0.0
        %284 = vmatpush1.xpose.msra.mxu0 0.0
        %285 = vmatprep.subr.mxu0 0.0
        %286 = vmatpush1.xpose.msra.mxu0 0.0
        %287 = vmatprep.subr.mxu0 0.0
        %288 = vmatpush1.xpose.msra.mxu0 0.0
        %289 = vmatprep.subr.mxu0 0.0
        %290 = vmatpush1.xpose.msra.mxu0 0.0
        %291 = vmatprep.subr.mxu0 0.0
        %292 = vmatpush1.xpose.msra.mxu0 0.0
        %293 = vmatprep.subr.mxu0 0.0
        %294 = vmatpush1.xpose.msra.mxu0 0.0
        %295 = vmatprep.subr.mxu0 0.0
        %296 = vmatpush1.xpose.msra.mxu0 0.0
        %297 = vmatprep.subr.mxu0 0.0
        %298 = vmatpush1.xpose.msra.mxu0 0.0
        %299 = vmatprep.subr.mxu0 0.0
        %300 = vmatpush1.xpose.msra.mxu0 0.0
        %301 = vmatprep.subr.mxu0 0.0
        %302 = vmatpush1.xpose.msra.mxu0 0.0
        %303 = vmatprep.mubr.f32.mxu0 0.0
        %304 = vmatmul.mubr.f32.gmra.mrb[0].mxu0 %v207
        %v305 = vpop.f32.mrb[0].mxu0
        %v306 = vadd.f32 0.0, %v305
        %v307 = vpop.f32.mrb[0].mxu0
        %308 = vmatprep.mubr.f32.mxu0 0.0
        %309 = vmatmul.mubr.f32.gmra.mrb[0].mxu0 %v208
        %v310 = vpop.f32.mrb[0].mxu0
        %v311 = vadd.f32 0.0, %v310
        %v312 = vpop.f32.mrb[0].mxu0
        %313 = vmatprep.mubr.f32.mxu0 0.0
        %314 = vmatmul.mubr.f32.gmra.mrb[0].mxu0 %v209
        %v315 = vpop.f32.mrb[0].mxu0
        %v316 = vadd.f32 0.0, %v315
        %v317 = vpop.f32.mrb[0].mxu0
        %318 = vmatprep.mubr.f32.mxu0 0.0
        %319 = vmatmul.mubr.f32.gmra.mrb[0].mxu0 %v210
        %v320 = vpop.f32.mrb[0].mxu0
        %v321 = vadd.f32 0.0, %v320
        %v322 = vpop.f32.mrb[0].mxu0
        %323 = vmatprep.mubr.f32.mxu0 0.0
        %324 = vmatmul.mubr.f32.gmra.mrb[0].mxu0 %v211
        %v325 = vpop.f32.mrb[0].mxu0
        %v326 = vadd.f32 0.0, %v325
        %v327 = vpop.f32.mrb[0].mxu0
        %328 = vmatprep.mubr.f32.mxu0 0.0
        %329 = vmatmul.mubr.f32.gmra.mrb[0].mxu0 %v212
        %v330 = vpop.f32.mrb[0].mxu0
        %v331 = vadd.f32 0.0, %v330
        %v332 = vpop.f32.mrb[0].mxu0
        %333 = vmatprep.mubr.f32.mxu0 0.0
        %334 = vmatmul.mubr.f32.gmra.mrb[0].mxu0 %v213
        %v335 = vpop.f32.mrb[0].mxu0
        %v336 = vadd.f32 0.0, %v335
        %v337 = vpop.f32.mrb[0].mxu0
        %338 = vmatprep.mubr.f32.mxu0 0.0
        %339 = vmatmul.mubr.f32.gmra.mrb[0].mxu0 %v214
        %v340 = vpop.f32.mrb[0].mxu0
        %v341 = vadd.f32 0.0, %v340
        %v342 = vpop.f32.mrb[0].mxu0
        %343 = vmatprep.mubr.f32.mxu0 0.0
        %344 = vmatmul.mubr.f32.gmra.mrb[0].mxu0 %v215
        %v345 = vpop.f32.mrb[0].mxu0
        %v346 = vadd.f32 0.0, %v345
        %v347 = vpop.f32.mrb[0].mxu0
        %348 = vmatprep.mubr.f32.mxu0 0.0
        %349 = vmatmul.mubr.f32.gmra.mrb[0].mxu0 %v216
        %v350 = vpop.f32.mrb[0].mxu0
        %v351 = vadd.f32 0.0, %v350
        %v352 = vpop.f32.mrb[0].mxu0
        %353 = vmatprep.mubr.f32.mxu0 0.0
        %354 = vmatmul.mubr.f32.gmra.mrb[0].mxu0 %v217
        %v355 = vpop.f32.mrb[0].mxu0
        %v356 = vadd.f32 0.0, %v355
        %v357 = vpop.f32.mrb[0].mxu0
        %358 = vmatprep.mubr.f32.mxu0 0.0
        %359 = vmatmul.mubr.f32.gmra.mrb[0].mxu0 %v218
        %v360 = vpop.f32.mrb[0].mxu0
        %v361 = vadd.f32 0.0, %v360
        %v362 = vpop.f32.mrb[0].mxu0
        %363 = vmatprep.mubr.f32.mxu0 0.0
        %364 = vmatmul.mubr.f32.gmra.mrb[0].mxu0 %v219
        %v365 = vpop.f32.mrb[0].mxu0
        %v366 = vadd.f32 0.0, %v365
        %v367 = vpop.f32.mrb[0].mxu0
        %368 = vmatprep.mubr.f32.mxu0 0.0
        %369 = vmatmul.mubr.f32.gmra.mrb[0].mxu0 %v220
        %v370 = vpop.f32.mrb[0].mxu0
        %v371 = vadd.f32 0.0, %v370
        %v372 = vpop.f32.mrb[0].mxu0
        %373 = vmatprep.mubr.f32.mxu0 0.0
        %374 = vmatmul.mubr.f32.gmra.mrb[0].mxu0 %v221
        %v375 = vpop.f32.mrb[0].mxu0
        %v376 = vadd.f32 0.0, %v375
        %v377 = vpop.f32.mrb[0].mxu0
        %378 = vmatprep.mubr.f32.mxu0 0.0
        %379 = vmatmul.mubr.f32.gmra.mrb[0].mxu0 %v222
        %v380 = vpop.f32.mrb[0].mxu0
        %v381 = vadd.f32 0.0, %v380
        %v382 = vpop.f32.mrb[0].mxu0
        %383 = vdwg.mxu0
        %385 = vrot.lane.b32.xlu0 %v306, 256
        %v386 = vpop.permute.xlu0 %385
        %s388 = sor.u32 256, 8
        %389 = vrot.lane.b32.xlu0 %v311, %s388
        %v390 = vpop.permute.xlu0 %389
        %s392 = sor.u32 256, 16
        %393 = vrot.lane.b32.xlu0 %v316, %s392
        %v394 = vpop.permute.xlu0 %393
        %s396 = sor.u32 256, 24
        %397 = vrot.lane.b32.xlu0 %v321, %s396
        %v398 = vpop.permute.xlu0 %397
        %s400 = sor.u32 256, 32
        %401 = vrot.lane.b32.xlu0 %v326, %s400
        %v402 = vpop.permute.xlu0 %401
        %s404 = sor.u32 256, 40
        %405 = vrot.lane.b32.xlu0 %v331, %s404
        %v406 = vpop.permute.xlu0 %405
        %s408 = sor.u32 256, 48
        %409 = vrot.lane.b32.xlu0 %v336, %s408
        %v410 = vpop.permute.xlu0 %409
        %s412 = sor.u32 256, 56
        %413 = vrot.lane.b32.xlu0 %v341, %s412
        %v414 = vpop.permute.xlu0 %413
        %s416 = sor.u32 256, 64
        %417 = vrot.lane.b32.xlu0 %v346, %s416
        %v418 = vpop.permute.xlu0 %417
        %s420 = sor.u32 256, 72
        %421 = vrot.lane.b32.xlu0 %v351, %s420
        %v422 = vpop.permute.xlu0 %421
        %s424 = sor.u32 256, 80
        %425 = vrot.lane.b32.xlu0 %v356, %s424
        %v426 = vpop.permute.xlu0 %425
        %s428 = sor.u32 256, 88
        %429 = vrot.lane.b32.xlu0 %v361, %s428
        %v430 = vpop.permute.xlu0 %429
        %s432 = sor.u32 256, 96
        %433 = vrot.lane.b32.xlu0 %v366, %s432
        %v434 = vpop.permute.xlu0 %433
        %s436 = sor.u32 256, 104
        %437 = vrot.lane.b32.xlu0 %v371, %s436
        %v438 = vpop.permute.xlu0 %437
        %s440 = sor.u32 256, 112
        %441 = vrot.lane.b32.xlu0 %v376, %s440
        %v442 = vpop.permute.xlu0 %441
        %s444 = sor.u32 256, 120
        %445 = vrot.lane.b32.xlu0 %v381, %s444
        %v446 = vpop.permute.xlu0 %445
        %v447 = vadd.f32 %v386, %v390
        %v448 = vadd.f32 %v447, %v394
        %v449 = vadd.f32 %v448, %v398
        %v450 = vadd.f32 %v449, %v402
        %v451 = vadd.f32 %v450, %v406
        %v452 = vadd.f32 %v451, %v410
        %v453 = vadd.f32 %v452, %v414
        %v454 = vadd.f32 %v453, %v418
        %v455 = vadd.f32 %v454, %v422
        %v456 = vadd.f32 %v455, %v426
        %v457 = vadd.f32 %v456, %v430
        %v458 = vadd.f32 %v457, %v434
        %v459 = vadd.f32 %v458, %v438
        %v460 = vadd.f32 %v459, %v442
        %v461 = vadd.f32 %v460, %v446
        %v462 = vrot.slane %v461, 4
        %v463 = vadd.f32 %v461, %v462
        %v464 = vrot.slane %v463, 2
        %v465 = vadd.f32 %v463, %v464
        %v466 = vrot.slane %v465, 1
        %v467 = vadd.f32 %v465, %v466
        %v468 = vmul.f32 %v467, 0.0078125
        %469 = vst [vmem:[%s203] sm:$0x1] %v468
        %s470 = scalar_lea.vmem %s169, 128 [#allocation2]
        %v471 = vld [vmem:[%s470] sm:$0xff]
        %v472 = vld [vmem:[%s470 + $0x8] sm:$0xff]
        %v473 = vld [vmem:[%s470 + $0x10] sm:$0xff]
        %v474 = vld [vmem:[%s470 + $0x18] sm:$0xff]
        %v475 = vld [vmem:[%s470 + $0x20] sm:$0xff]
        %v476 = vld [vmem:[%s470 + $0x28] sm:$0xff]
        %v477 = vld [vmem:[%s470 + $0x30] sm:$0xff]
        %v478 = vld [vmem:[%s470 + $0x38] sm:$0xff]
        %v479 = vld [vmem:[%s470 + $0x40] sm:$0xff]
        %v480 = vld [vmem:[%s470 + $0x48] sm:$0xff]
        %v481 = vld [vmem:[%s470 + $0x50] sm:$0xff]
        %v482 = vld [vmem:[%s470 + $0x58] sm:$0xff]
        %v483 = vld [vmem:[%s470 + $0x60] sm:$0xff]
        %v484 = vld [vmem:[%s470 + $0x68] sm:$0xff]
        %v485 = vld [vmem:[%s470 + $0x70] sm:$0xff]
        %v486 = vld [vmem:[%s470 + $0x78] sm:$0xff]
        %s487 = scalar_lea.vmem %s178, 128 [#allocation5]
        %v488 = vld [vmem:[%s487] sm:$0xff]
        %v489 = vld [vmem:[%s487 + $0x8] sm:$0xff]
        %v490 = vld [vmem:[%s487 + $0x10] sm:$0xff]
        %v491 = vld [vmem:[%s487 + $0x18] sm:$0xff]
        %v492 = vld [vmem:[%s487 + $0x20] sm:$0xff]
        %v493 = vld [vmem:[%s487 + $0x28] sm:$0xff]
        %v494 = vld [vmem:[%s487 + $0x30] sm:$0xff]
        %v495 = vld [vmem:[%s487 + $0x38] sm:$0xff]
        %v496 = vld [vmem:[%s487 + $0x40] sm:$0xff]
        %v497 = vld [vmem:[%s487 + $0x48] sm:$0xff]
        %v498 = vld [vmem:[%s487 + $0x50] sm:$0xff]
        %v499 = vld [vmem:[%s487 + $0x58] sm:$0xff]
        %v500 = vld [vmem:[%s487 + $0x60] sm:$0xff]
        %v501 = vld [vmem:[%s487 + $0x68] sm:$0xff]
        %v502 = vld [vmem:[%s487 + $0x70] sm:$0xff]
        %v503 = vld [vmem:[%s487 + $0x78] sm:$0xff]
        %504 = vmatprep.subr.mxu0 0.0
        %505 = vmatpush1.xpose.msra.mxu0 %v488
        %506 = vmatprep.subr.mxu0 0.0
        %507 = vmatpush1.xpose.msra.mxu0 %v489
        %508 = vmatprep.subr.mxu0 0.0
        %509 = vmatpush1.xpose.msra.mxu0 %v490
        %510 = vmatprep.subr.mxu0 0.0
        %511 = vmatpush1.xpose.msra.mxu0 %v491
        %512 = vmatprep.subr.mxu0 0.0
        %513 = vmatpush1.xpose.msra.mxu0 %v492
        %514 = vmatprep.subr.mxu0 0.0
        %515 = vmatpush1.xpose.msra.mxu0 %v493
        %516 = vmatprep.subr.mxu0 0.0
        %517 = vmatpush1.xpose.msra.mxu0 %v494
        %518 = vmatprep.subr.mxu0 0.0
        %519 = vmatpush1.xpose.msra.mxu0 %v495
        %520 = vmatprep.subr.mxu0 0.0
        %521 = vmatpush1.xpose.msra.mxu0 %v496
        %522 = vmatprep.subr.mxu0 0.0
        %523 = vmatpush1.xpose.msra.mxu0 %v497
        %524 = vmatprep.subr.mxu0 0.0
        %525 = vmatpush1.xpose.msra.mxu0 %v498
        %526 = vmatprep.subr.mxu0 0.0
        %527 = vmatpush1.xpose.msra.mxu0 %v499
        %528 = vmatprep.subr.mxu0 0.0
        %529 = vmatpush1.xpose.msra.mxu0 %v500
        %530 = vmatprep.subr.mxu0 0.0
        %531 = vmatpush1.xpose.msra.mxu0 %v501
        %532 = vmatprep.subr.mxu0 0.0
        %533 = vmatpush1.xpose.msra.mxu0 %v502
        %534 = vmatprep.subr.mxu0 0.0
        %535 = vmatpush1.xpose.msra.mxu0 %v503
        %536 = vmatprep.subr.mxu0 0.0
        %537 = vmatpush1.xpose.msra.mxu0 0.0
        %538 = vmatprep.subr.mxu0 0.0
        %539 = vmatpush1.xpose.msra.mxu0 0.0
        %540 = vmatprep.subr.mxu0 0.0
        %541 = vmatpush1.xpose.msra.mxu0 0.0
        %542 = vmatprep.subr.mxu0 0.0
        %543 = vmatpush1.xpose.msra.mxu0 0.0
        %544 = vmatprep.subr.mxu0 0.0
        %545 = vmatpush1.xpose.msra.mxu0 0.0
        %546 = vmatprep.subr.mxu0 0.0
        %547 = vmatpush1.xpose.msra.mxu0 0.0
        %548 = vmatprep.subr.mxu0 0.0
        %549 = vmatpush1.xpose.msra.mxu0 0.0
        %550 = vmatprep.subr.mxu0 0.0
        %551 = vmatpush1.xpose.msra.mxu0 0.0
        %552 = vmatprep.subr.mxu0 0.0
        %553 = vmatpush1.xpose.msra.mxu0 0.0
        %554 = vmatprep.subr.mxu0 0.0
        %555 = vmatpush1.xpose.msra.mxu0 0.0
        %556 = vmatprep.subr.mxu0 0.0
        %557 = vmatpush1.xpose.msra.mxu0 0.0
        %558 = vmatprep.subr.mxu0 0.0
        %559 = vmatpush1.xpose.msra.mxu0 0.0
        %560 = vmatprep.subr.mxu0 0.0
        %561 = vmatpush1.xpose.msra.mxu0 0.0
        %562 = vmatprep.subr.mxu0 0.0
        %563 = vmatpush1.xpose.msra.mxu0 0.0
        %564 = vmatprep.subr.mxu0 0.0
        %565 = vmatpush1.xpose.msra.mxu0 0.0
        %566 = vmatprep.subr.mxu0 0.0
        %567 = vmatpush1.xpose.msra.mxu0 0.0
        %568 = vmatprep.mubr.f32.mxu0 0.0
        %569 = vmatmul.mubr.f32.gmra.mrb[0].mxu0 %v471
        %v570 = vpop.f32.mrb[0].mxu0
        %v571 = vadd.f32 0.0, %v570
        %v572 = vpop.f32.mrb[0].mxu0
        %573 = vmatprep.mubr.f32.mxu0 0.0
        %574 = vmatmul.mubr.f32.gmra.mrb[0].mxu0 %v472
        %v575 = vpop.f32.mrb[0].mxu0
        %v576 = vadd.f32 0.0, %v575
        %v577 = vpop.f32.mrb[0].mxu0
        %578 = vmatprep.mubr.f32.mxu0 0.0
        %579 = vmatmul.mubr.f32.gmra.mrb[0].mxu0 %v473
        %v580 = vpop.f32.mrb[0].mxu0
        %v581 = vadd.f32 0.0, %v580
        %v582 = vpop.f32.mrb[0].mxu0
        %583 = vmatprep.mubr.f32.mxu0 0.0
        %584 = vmatmul.mubr.f32.gmra.mrb[0].mxu0 %v474
        %v585 = vpop.f32.mrb[0].mxu0
        %v586 = vadd.f32 0.0, %v585
        %v587 = vpop.f32.mrb[0].mxu0
        %588 = vmatprep.mubr.f32.mxu0 0.0
        %589 = vmatmul.mubr.f32.gmra.mrb[0].mxu0 %v475
        %v590 = vpop.f32.mrb[0].mxu0
        %v591 = vadd.f32 0.0, %v590
        %v592 = vpop.f32.mrb[0].mxu0
        %593 = vmatprep.mubr.f32.mxu0 0.0
        %594 = vmatmul.mubr.f32.gmra.mrb[0].mxu0 %v476
        %v595 = vpop.f32.mrb[0].mxu0
        %v596 = vadd.f32 0.0, %v595
        %v597 = vpop.f32.mrb[0].mxu0
        %598 = vmatprep.mubr.f32.mxu0 0.0
        %599 = vmatmul.mubr.f32.gmra.mrb[0].mxu0 %v477
        %v600 = vpop.f32.mrb[0].mxu0
        %v601 = vadd.f32 0.0, %v600
        %v602 = vpop.f32.mrb[0].mxu0
        %603 = vmatprep.mubr.f32.mxu0 0.0
        %604 = vmatmul.mubr.f32.gmra.mrb[0].mxu0 %v478
        %v605 = vpop.f32.mrb[0].mxu0
        %v606 = vadd.f32 0.0, %v605
        %v607 = vpop.f32.mrb[0].mxu0
        %608 = vmatprep.mubr.f32.mxu0 0.0
        %609 = vmatmul.mubr.f32.gmra.mrb[0].mxu0 %v479
        %v610 = vpop.f32.mrb[0].mxu0
        %v611 = vadd.f32 0.0, %v610
        %v612 = vpop.f32.mrb[0].mxu0
        %613 = vmatprep.mubr.f32.mxu0 0.0
        %614 = vmatmul.mubr.f32.gmra.mrb[0].mxu0 %v480
        %v615 = vpop.f32.mrb[0].mxu0
        %v616 = vadd.f32 0.0, %v615
        %v617 = vpop.f32.mrb[0].mxu0
        %618 = vmatprep.mubr.f32.mxu0 0.0
        %619 = vmatmul.mubr.f32.gmra.mrb[0].mxu0 %v481
        %v620 = vpop.f32.mrb[0].mxu0
        %v621 = vadd.f32 0.0, %v620
        %v622 = vpop.f32.mrb[0].mxu0
        %623 = vmatprep.mubr.f32.mxu0 0.0
        %624 = vmatmul.mubr.f32.gmra.mrb[0].mxu0 %v482
        %v625 = vpop.f32.mrb[0].mxu0
        %v626 = vadd.f32 0.0, %v625
        %v627 = vpop.f32.mrb[0].mxu0
        %628 = vmatprep.mubr.f32.mxu0 0.0
        %629 = vmatmul.mubr.f32.gmra.mrb[0].mxu0 %v483
        %v630 = vpop.f32.mrb[0].mxu0
        %v631 = vadd.f32 0.0, %v630
        %v632 = vpop.f32.mrb[0].mxu0
        %633 = vmatprep.mubr.f32.mxu0 0.0
        %634 = vmatmul.mubr.f32.gmra.mrb[0].mxu0 %v484
        %v635 = vpop.f32.mrb[0].mxu0
        %v636 = vadd.f32 0.0, %v635
        %v637 = vpop.f32.mrb[0].mxu0
        %638 = vmatprep.mubr.f32.mxu0 0.0
        %639 = vmatmul.mubr.f32.gmra.mrb[0].mxu0 %v485
        %v640 = vpop.f32.mrb[0].mxu0
        %v641 = vadd.f32 0.0, %v640
        %v642 = vpop.f32.mrb[0].mxu0
        %643 = vmatprep.mubr.f32.mxu0 0.0
        %644 = vmatmul.mubr.f32.gmra.mrb[0].mxu0 %v486
        %v645 = vpop.f32.mrb[0].mxu0
        %v646 = vadd.f32 0.0, %v645
        %v647 = vpop.f32.mrb[0].mxu0
        %648 = vdwg.mxu0
        %650 = vrot.lane.b32.xlu0 %v571, 256
        %v651 = vpop.permute.xlu0 %650
        %s653 = sor.u32 256, 8
        %654 = vrot.lane.b32.xlu0 %v576, %s653
        %v655 = vpop.permute.xlu0 %654
        %s657 = sor.u32 256, 16
        %658 = vrot.lane.b32.xlu0 %v581, %s657
        %v659 = vpop.permute.xlu0 %658
        %s661 = sor.u32 256, 24
        %662 = vrot.lane.b32.xlu0 %v586, %s661
        %v663 = vpop.permute.xlu0 %662
        %s665 = sor.u32 256, 32
        %666 = vrot.lane.b32.xlu0 %v591, %s665
        %v667 = vpop.permute.xlu0 %666
        %s669 = sor.u32 256, 40
        %670 = vrot.lane.b32.xlu0 %v596, %s669
        %v671 = vpop.permute.xlu0 %670
        %s673 = sor.u32 256, 48
        %674 = vrot.lane.b32.xlu0 %v601, %s673
        %v675 = vpop.permute.xlu0 %674
        %s677 = sor.u32 256, 56
        %678 = vrot.lane.b32.xlu0 %v606, %s677
        %v679 = vpop.permute.xlu0 %678
        %s681 = sor.u32 256, 64
        %682 = vrot.lane.b32.xlu0 %v611, %s681
        %v683 = vpop.permute.xlu0 %682
        %s685 = sor.u32 256, 72
        %686 = vrot.lane.b32.xlu0 %v616, %s685
        %v687 = vpop.permute.xlu0 %686
        %s689 = sor.u32 256, 80
        %690 = vrot.lane.b32.xlu0 %v621, %s689
        %v691 = vpop.permute.xlu0 %690
        %s693 = sor.u32 256, 88
        %694 = vrot.lane.b32.xlu0 %v626, %s693
        %v695 = vpop.permute.xlu0 %694
        %s697 = sor.u32 256, 96
        %698 = vrot.lane.b32.xlu0 %v631, %s697
        %v699 = vpop.permute.xlu0 %698
        %s701 = sor.u32 256, 104
        %702 = vrot.lane.b32.xlu0 %v636, %s701
        %v703 = vpop.permute.xlu0 %702
        %s705 = sor.u32 256, 112
        %706 = vrot.lane.b32.xlu0 %v641, %s705
        %v707 = vpop.permute.xlu0 %706
        %s709 = sor.u32 256, 120
        %710 = vrot.lane.b32.xlu0 %v646, %s709
        %v711 = vpop.permute.xlu0 %710
        %v712 = vadd.f32 %v651, %v655
        %v713 = vadd.f32 %v712, %v659
        %v714 = vadd.f32 %v713, %v663
        %v715 = vadd.f32 %v714, %v667
        %v716 = vadd.f32 %v715, %v671
        %v717 = vadd.f32 %v716, %v675
        %v718 = vadd.f32 %v717, %v679
        %v719 = vadd.f32 %v718, %v683
        %v720 = vadd.f32 %v719, %v687
        %v721 = vadd.f32 %v720, %v691
        %v722 = vadd.f32 %v721, %v695
        %v723 = vadd.f32 %v722, %v699
        %v724 = vadd.f32 %v723, %v703
        %v725 = vadd.f32 %v724, %v707
        %v726 = vadd.f32 %v725, %v711
        %v727 = vrot.slane %v726, 4
        %v728 = vadd.f32 %v726, %v727
        %v729 = vrot.slane %v728, 2
        %v730 = vadd.f32 %v728, %v729
        %v731 = vrot.slane %v730, 1
        %v732 = vadd.f32 %v730, %v731
        %v733 = vmul.f32 %v732, 0.0078125
        %s734 = scalar_lea.vmem %s203, 1 [#allocation7]
        %735 = vst [vmem:[%s734] sm:$0x1] %v733
        %s736 = sand.u32 %s82, 1
        %s737 = scalar_lea.sflag [#allocation4], %s736
        %s738 = sand.u32 %s82, 1
        %s739 = smul.addr %s738, 2
        %s740 = scalar_lea.vmem [#allocation7], %s739
        // Predicated region
        $region37: #{tpu_custom_call.1} parent=27 // pred_check
          %p741 = pneg %p92
        $region38: #{tpu_custom_call.1} parent=27 // pred_check_branch
          %743 = sbr.rel (%p741) target = $region40
        $region39: #{tpu_custom_call.1} parent=27 // pred_region
          %s744 = smul.u32 2, %s22
          %s746 = ssub.s32 32, 32
          %747 = vsyncadd %s737, %s746
          %s748 = smul.addr %s744, 16
          %s749 = scalar_lea.hbm %s2, %s748
          %s750 = sshll.u32 %s740, 4
          %s751 = int_to_ptr.vmem [resolvable:$true] %s750
          %756 = dma.vmem_to_hbm [thread:$0]  %s751, 32, %s749, %s737, 16, 16, 1
        $region40: #{tpu_custom_call.1} parent=27 // pred_fallthru
          _
      $region28: #{tpu_custom_call.1} parent=5 // pred_fallthru
        _
      %p757 = scmp.le.s32.totalorder 2, %s17
      // Predicated region
      $region41: #{tpu_custom_call.1} parent=5 // pred_check
        %p758 = pneg %p757
      $region42: #{tpu_custom_call.1} parent=5 // pred_check_branch
        %760 = sbr.rel (%p758) target = $region44
      $region43: #{tpu_custom_call.1} parent=5 // pred_region
        %s761 = ssub.s32 %s17, 2
        // Predicated region
        $region45: #{tpu_custom_call.1} parent=43 // pred_check
          %p762 = pneg %p98
        $region46: #{tpu_custom_call.1} parent=43 // pred_check_branch
          %764 = sbr.rel (%p762) target = $region48
        $region47: #{tpu_custom_call.1} parent=43 // pred_region
          %s765 = sand.u32 %s83, 1
          %s766 = scalar_lea.sflag [#allocation4], %s765
          %s767 = sand.u32 %s83, 1
          %s768 = smul.addr %s767, 2
          %s769 = scalar_lea.vmem [#allocation7], %s768
          %770 = dma.done %s766, 32
        $region48: #{tpu_custom_call.1} parent=43 // pred_fallthru
          _
      $region44: #{tpu_custom_call.1} parent=5 // pred_fallthru
        _
    $region6: #{tpu_custom_call.1} parent=1 // loop_footer
      %s21 = sadd.s32 1, %s17
    $region7: #{tpu_custom_call.1} parent=1 // loop_footer_branch
      %16 = sbr.rel target = $region3
    $region8: #{tpu_custom_call.1} parent=1 // loop_exit
      _
    %771 = vsyncpa [#allocation3], 1
    %s772 = scalar_lea.sflag [#allocation3], 1
    %773 = vsyncpa %s772, 1
    %774 = vsyncpa [#allocation6], 1
    %s775 = scalar_lea.sflag [#allocation6], 1
    %776 = vsyncpa %s775, 1
    %777 = vsyncpa [#allocation4], 1
    %s778 = scalar_lea.sflag [#allocation4], 1
    %779 = vsyncpa %s778, 1

</llo_original>
